<compile_context>
chip_gen: v7x
topology: tpu7x:2x2x1
jax: 0.10.0
libtpu: 0.0.40
codegen_flags: <defaults>
</compile_context>

<pallas_src>
import jax
import jax.numpy as jnp
from jax.experimental import pallas as pl
from jax.experimental.pallas import tpu as pltpu

LN_EPS = 1e-5  # PyTorch nn.LayerNorm default


def _round_up(x, m):
    return ((x + m - 1) // m) * m


# ----------------------------------------------------------------------------
# Kernel
# ----------------------------------------------------------------------------
def _mlm_kernel(x_ref, w1_ref, b1_ref, gamma_ref, beta_ref,
                w2_ref, b2_ref, o_ref, h_ref):
    # x_ref:      (tm, num_inputs)   compute dtype (bf16)
    # w1_ref:     (num_inputs, num_hiddens)    b1/gamma/beta: (1, num_hiddens) f32
    # w2_ref:     (num_hiddens, tn)            b2_ref: (1, tn) f32
    # o_ref:      (tm, tn)
    # h_ref:      (tm, num_hiddens) scratch in w2's dtype, carried across j

    # Linear1 + ReLU + LayerNorm: once per row tile, cached for all vocab tiles.
    @pl.when(pl.program_id(1) == 0)
    def _():
        h = jnp.dot(x_ref[...], w1_ref[...],
                    preferred_element_type=jnp.float32)
        h = h + b1_ref[...]
        h = jnp.maximum(h, 0.0)
        # LayerNorm over num_hiddens (biased variance, eps inside rsqrt), f32.
        mean = jnp.mean(h, axis=-1, keepdims=True)
        cent = h - mean
        var = jnp.mean(cent * cent, axis=-1, keepdims=True)
        h = cent * jax.lax.rsqrt(var + LN_EPS)
        h = h * gamma_ref[...] + beta_ref[...]
        h_ref[...] = h.astype(h_ref.dtype)

    # Linear2: per-vocab-tile GEMM against the cached (already bf16) hidden.
    y = jnp.dot(h_ref[...], w2_ref[...], preferred_element_type=jnp.float32)
    y = y + b2_ref[...]
    o_ref[...] = y.astype(o_ref.dtype)


# ----------------------------------------------------------------------------
# One-time parameter preparation (hoisted out of the per-call path)
# ----------------------------------------------------------------------------
def prepare_params(params, *, compute_dtype=jnp.bfloat16, vocab_tile=1024):
    """Cast GEMM weights to `compute_dtype`, pad vocab to a multiple of
    `vocab_tile` (lane-dense, multiple of 128), reshape vectors to rank-2.
    Call once at parameter-load time, not per forward call."""
    num_inputs, num_hiddens = params["w1"].shape
    vocab_size = params["w2"].shape[1]

    vocab_tile = max(128, _round_up(min(vocab_tile,
                                        _round_up(vocab_size, 128)), 128))
    n_pad = _round_up(vocab_size, vocab_tile)

    w1 = params["w1"].astype(compute_dtype)
    w2 = params["w2"].astype(compute_dtype)
    b2 = params["b2"].astype(jnp.float32)
    if n_pad != vocab_size:
        w2 = jnp.pad(w2, ((0, 0), (0, n_pad - vocab_size)))
        b2 = jnp.pad(b2, ((0, n_pad - vocab_size),))

    return {
        "w1": w1,
        "b1_2d": params["b1"].astype(jnp.float32).reshape(1, num_hiddens),
        "gamma_2d": params["gamma"].astype(jnp.float32).reshape(1, num_hiddens),
        "beta_2d": params["beta"].astype(jnp.float32).reshape(1, num_hiddens),
        "w2": w2,
        "b2_2d": b2.reshape(1, n_pad),
        "vocab_size": vocab_size,
        "vocab_tile": vocab_tile,
    }


# ----------------------------------------------------------------------------
# VMEM footprint model (double buffers included)
# ----------------------------------------------------------------------------
def _vmem_bytes(tm, tn, num_inputs, num_hiddens, in_bytes, out_bytes):
    x_tile = 2 * tm * num_inputs * in_bytes
    w1 = 2 * num_inputs * num_hiddens * in_bytes
    vecs = 3 * 2 * num_hiddens * 4
    w2_tile = 2 * num_hiddens * tn * in_bytes
    b2_tile = 2 * tn * 4
    out_tile = 2 * tm * tn * out_bytes
    h_scratch = tm * num_hiddens * in_bytes
    return x_tile + w1 + vecs + w2_tile + b2_tile + out_tile + h_scratch


def _max_tm(budget, tn, num_inputs, num_hiddens, in_bytes, out_bytes):
    fixed = (2 * num_inputs * num_hiddens * in_bytes + 3 * 2 * num_hiddens * 4
             + 2 * num_hiddens * tn * in_bytes + 2 * tn * 4)
    per_row = (2 * num_inputs * in_bytes + 2 * tn * out_bytes
               + num_hiddens * in_bytes)
    avail = max(budget - fixed, 0)
    return max(16, (avail // per_row) // 16 * 16)


# ----------------------------------------------------------------------------
# Forward
# ----------------------------------------------------------------------------
def masklm_forward(X, pred_positions, prepared, *, tm=None, tn=None,
                   out_dtype=jnp.bfloat16, vmem_budget_bytes=48 << 20,
                   min_row_tiles=1):
    """Reproduces MaskLM.forward.

    X:              (batch, seq_len, num_inputs)
    pred_positions: (batch, num_pred) int32
    prepared:       output of prepare_params(params)
    returns:        (batch, num_pred, vocab_size) in `out_dtype`
    """
    w1 = prepared["w1"]
    num_inputs, num_hiddens = w1.shape
    n_pad = prepared["w2"].shape[1]
    vocab_size = prepared["vocab_size"]
    batch, seq_len, _ = X.shape
    num_pred = pred_positions.shape[1]

    in_bytes = jnp.dtype(w1.dtype).itemsize
    out_bytes = jnp.dtype(out_dtype).itemsize

    # --- gather of masked positions (glue, plain JAX) -----------------------
    # TODO(synk): for very large M, fuse this gather into the kernel via
    # PrefetchScalarGridSpec scalar-prefetched row indices.
    flat_pos = pred_positions.reshape(-1)
    batch_idx = jnp.repeat(jnp.arange(batch, dtype=jnp.int32), num_pred)
    masked_X = X[batch_idx, flat_pos].astype(w1.dtype)          # (M, num_inputs)

    # --- vocab tiling (must divide the pre-padded vocab) ---------------------
    if tn is None:
        tn = prepared["vocab_tile"]
    tn = min(tn, n_pad)
    assert n_pad % tn == 0, "tn must divide the pre-padded vocab size"

    # --- row tiling: single full-M tile by default -> w2 streamed once ------
    M = batch * num_pred
    m_pad16 = _round_up(M, 16)                 # bf16 sublane alignment
    if tm is None:
        tm = _max_tm(vmem_budget_bytes, tn, num_inputs, num_hiddens,
                     in_bytes, out_bytes)
    tm = max(16, min(tm, m_pad16))
    if min_row_tiles > 1:                      # e.g. v7x megacore: 2 row tiles
        tm = max(16, min(tm, (m_pad16 // min_row_tiles) // 16 * 16))
    tm = max(16, (tm // 16) * 16)
    m_pad = _round_up(M, tm)
    if m_pad != M:
        masked_X = jnp.pad(masked_X, ((0, m_pad - M), (0, 0)))

    grid = (m_pad // tm, n_pad // tn)

    est = _vmem_bytes(tm, tn, num_inputs, num_hiddens, in_bytes, out_bytes)
    vmem_limit = int(max(est + (4 << 20), 32 << 20))

    out = pl.pallas_call(
        _mlm_kernel,
        out_shape=jax.ShapeDtypeStruct((m_pad, n_pad), out_dtype),
        grid_spec=pltpu.PrefetchScalarGridSpec(
            num_scalar_prefetch=0,
            grid=grid,
            in_specs=[
                pl.BlockSpec((tm, num_inputs), lambda i, j: (i, 0)),           # x rows
                pl.BlockSpec((num_inputs, num_hiddens), lambda i, j: (0, 0)),  # w1
                pl.BlockSpec((1, num_hiddens), lambda i, j: (0, 0)),           # b1
                pl.BlockSpec((1, num_hiddens), lambda i, j: (0, 0)),           # gamma
                pl.BlockSpec((1, num_hiddens), lambda i, j: (0, 0)),           # beta
                pl.BlockSpec((num_hiddens, tn), lambda i, j: (0, j)),          # w2 tile
                pl.BlockSpec((1, tn), lambda i, j: (0, j)),                    # b2 tile
            ],
            out_specs=pl.BlockSpec((tm, tn), lambda i, j: (i, j)),
            scratch_shapes=[pltpu.VMEM((tm, num_hiddens), prepared["w2"].dtype)],
        ),
        compiler_params=pltpu.CompilerParams(
            dimension_semantics=("parallel", "arbitrary"),
            vmem_limit_bytes=vmem_limit),
    )(masked_X, w1, prepared["b1_2d"], prepared["gamma_2d"],
      prepared["beta_2d"], prepared["w2"], prepared["b2_2d"])

    out = out[:M, :vocab_size]
    return out.reshape(batch, num_pred, vocab_size)


# ----------------------------------------------------------------------------
# Pure-JAX reference (f32) for correctness check
# ----------------------------------------------------------------------------
def _reference(X, pred_positions, params):
    w1, b1, gamma, beta, w2, b2 = (params[k] for k in
                                   ("w1", "b1", "gamma", "beta", "w2", "b2"))
    batch = X.shape[0]
    num_pred = pred_positions.shape[1]
    flat_pos = pred_positions.reshape(-1)
    batch_idx = jnp.repeat(jnp.arange(batch, dtype=jnp.int32), num_pred)
    mx = X[batch_idx, flat_pos].reshape(batch, num_pred, -1)
    h = jnp.maximum(mx @ w1 + b1, 0.0)
    mean = jnp.mean(h, axis=-1, keepdims=True)
    var = jnp.mean((h - mean) ** 2, axis=-1, keepdims=True)
    h = (h - mean) * jax.lax.rsqrt(var + LN_EPS) * gamma + beta
    return h @ w2 + b2


if __name__ == "__main__":
    # Small shapes consistent with the module's forward.
    batch, seq_len = 4, 8
    num_inputs, num_hiddens, vocab_size = 64, 64, 1024
    num_pred = 6

    key = jax.random.PRNGKey(0)
    kx, kp, k1, k2, k3, k4 = jax.random.split(key, 6)

    X = jax.random.normal(kx, (batch, seq_len, num_inputs), dtype=jnp.float32)
    pred_positions = jax.random.randint(kp, (batch, num_pred), 0, seq_len,
                                        dtype=jnp.int32)

    params = {
        "w1": jax.random.normal(k1, (num_inputs, num_hiddens), jnp.float32) * 0.05,
        "b1": jax.random.normal(k2, (num_hiddens,), jnp.float32) * 0.02,
        "gamma": jnp.ones((num_hiddens,), jnp.float32),
        "beta": jnp.zeros((num_hiddens,), jnp.float32),
        "w2": jax.random.normal(k3, (num_hiddens, vocab_size), jnp.float32) * 0.05,
        "b2": jax.random.normal(k4, (vocab_size,), jnp.float32) * 0.02,
    }

    y_ref = _reference(X, pred_positions, params)

    # 1) Multi-tile path: 2 row tiles (row pad), 2 vocab tiles (cached h reuse).
    prep_small = prepare_params(params, vocab_tile=512)
    y1 = masklm_forward(X, pred_positions, prep_small, tm=16)
    y1 = jax.block_until_ready(y1)
    assert y1.shape == (batch, num_pred, vocab_size)
    assert jnp.allclose(y1.astype(jnp.float32), y_ref, atol=3e-2, rtol=3e-2), \
        "mismatch vs reference (multi-tile path)"

    # 2) Default path: auto tm (single full-M row tile -> w2 streamed once).
    prep_big = prepare_params(params, vocab_tile=1024)
    y2 = masklm_forward(X, pred_positions, prep_big)
    y2 = jax.block_until_ready(y2)
    assert y2.shape == (batch, num_pred, vocab_size)
    assert jnp.allclose(y2.astype(jnp.float32), y_ref, atol=3e-2, rtol=3e-2), \
        "mismatch vs reference (default path)"

    print("KERNEL_OK")
</pallas_src>

<mosaic_0001>
module attributes {stable_mosaic.version = 11 : i64} {
  func.func @_mlm_kernel(%arg0: i32, %arg1: i32, %arg2: memref<16x64xbf16, #tpu.memory_space<vmem>>, %arg3: memref<64x64xbf16, #tpu.memory_space<vmem>>, %arg4: memref<1x64xf32, #tpu.memory_space<vmem>>, %arg5: memref<1x64xf32, #tpu.memory_space<vmem>>, %arg6: memref<1x64xf32, #tpu.memory_space<vmem>>, %arg7: memref<64x512xbf16, #tpu.memory_space<vmem>>, %arg8: memref<1x512xf32, #tpu.memory_space<vmem>>, %arg9: memref<16x512xbf16, #tpu.memory_space<vmem>>, %arg10: memref<16x64xbf16, #tpu.memory_space<vmem>>) attributes {dimension_semantics = [#tpu.dimension_semantics<parallel>, #tpu.dimension_semantics<arbitrary>], iteration_bounds = array<i64: 2, 2>, scalar_prefetch = 0 : i64, scratch_operands = 1 : i64, tpu.core_type = #tpu.core_type<tc>, window_params = [{transform_indices = @transform_0, window_bounds = array<i64: 16, 64>}, {pipeline_mode = #tpu.pipeline_mode<synchronous>, transform_indices = @transform_1, window_bounds = array<i64: 64, 64>}, {pipeline_mode = #tpu.pipeline_mode<synchronous>, transform_indices = @transform_2, window_bounds = array<i64: 1, 64>}, {pipeline_mode = #tpu.pipeline_mode<synchronous>, transform_indices = @transform_3, window_bounds = array<i64: 1, 64>}, {pipeline_mode = #tpu.pipeline_mode<synchronous>, transform_indices = @transform_4, window_bounds = array<i64: 1, 64>}, {transform_indices = @transform_5, window_bounds = array<i64: 64, 512>}, {transform_indices = @transform_6, window_bounds = array<i64: 1, 512>}, {transform_indices = @transform_7, window_bounds = array<i64: 16, 512>}]} {
    %c0_i32 = arith.constant 0 : i32
    %0 = arith.cmpi eq, %arg1, %c0_i32 : i32
    %1 = arith.extui %0 : i1 to i32
    %c0_i32_0 = arith.constant 0 : i32
    %2 = arith.cmpi ne, %1, %c0_i32_0 : i32
    scf.if %2 {
      %c0_8 = arith.constant 0 : index
      %c0_9 = arith.constant 0 : index
      %11 = vector.load %arg2[%c0_8, %c0_9] : memref<16x64xbf16, #tpu.memory_space<vmem>>, vector<16x64xbf16>
      %c0_10 = arith.constant 0 : index
      %c0_11 = arith.constant 0 : index
      %12 = vector.load %arg3[%c0_10, %c0_11] : memref<64x64xbf16, #tpu.memory_space<vmem>>, vector<64x64xbf16>
      %cst_12 = arith.constant dense<0.000000e+00> : vector<16x64xf32>
      %13 = tpu.matmul %11, %12, %cst_12 {dimension_numbers = #tpu.dot_dimension_numbers<[1], [0], [0], [1], [0, 0, 1, 1], [], []>} : vector<16x64xbf16>, vector<64x64xbf16>, vector<16x64xf32> -> vector<16x64xf32>
      %c0_13 = arith.constant 0 : index
      %c0_14 = arith.constant 0 : index
      %14 = vector.load %arg4[%c0_13, %c0_14] : memref<1x64xf32, #tpu.memory_space<vmem>>, vector<1x64xf32>
      %15 = vector.broadcast %14 : vector<1x64xf32> to vector<16x64xf32>
      %16 = arith.addf %13, %15 : vector<16x64xf32>
      %cst_15 = arith.constant 0.000000e+00 : f32
      %17 = vector.broadcast %cst_15 : f32 to vector<16x64xf32>
      %18 = arith.maximumf %16, %17 : vector<16x64xf32>
      %cst_16 = arith.constant dense<0.000000e+00> : vector<16xf32>
      %19 = vector.multi_reduction <add>, %18, %cst_16 [1] : vector<16x64xf32> to vector<16xf32>
      %20 = vector.shape_cast %19 : vector<16xf32> to vector<16x1xf32>
      %cst_17 = arith.constant 6.400000e+01 : f32
      %21 = vector.broadcast %cst_17 : f32 to vector<16x1xf32>
      %22 = arith.divf %20, %21 : vector<16x1xf32>
      %23 = vector.broadcast %22 : vector<16x1xf32> to vector<16x64xf32>
      %24 = arith.subf %18, %23 : vector<16x64xf32>
      %25 = arith.mulf %24, %24 : vector<16x64xf32>
      %cst_18 = arith.constant dense<0.000000e+00> : vector<16xf32>
      %26 = vector.multi_reduction <add>, %25, %cst_18 [1] : vector<16x64xf32> to vector<16xf32>
      %27 = vector.shape_cast %26 : vector<16xf32> to vector<16x1xf32>
      %cst_19 = arith.constant 6.400000e+01 : f32
      %28 = vector.broadcast %cst_19 : f32 to vector<16x1xf32>
      %29 = arith.divf %27, %28 : vector<16x1xf32>
      %cst_20 = arith.constant 9.99999974E-6 : f32
      %30 = vector.broadcast %cst_20 : f32 to vector<16x1xf32>
      %31 = arith.addf %29, %30 : vector<16x1xf32>
      %32 = math.rsqrt %31 : vector<16x1xf32>
      %33 = vector.broadcast %32 : vector<16x1xf32> to vector<16x64xf32>
      %34 = arith.mulf %24, %33 : vector<16x64xf32>
      %c0_21 = arith.constant 0 : index
      %c0_22 = arith.constant 0 : index
      %35 = vector.load %arg5[%c0_21, %c0_22] : memref<1x64xf32, #tpu.memory_space<vmem>>, vector<1x64xf32>
      %36 = vector.broadcast %35 : vector<1x64xf32> to vector<16x64xf32>
      %37 = arith.mulf %34, %36 : vector<16x64xf32>
      %c0_23 = arith.constant 0 : index
      %c0_24 = arith.constant 0 : index
      %38 = vector.load %arg6[%c0_23, %c0_24] : memref<1x64xf32, #tpu.memory_space<vmem>>, vector<1x64xf32>
      %39 = vector.broadcast %38 : vector<1x64xf32> to vector<16x64xf32>
      %40 = arith.addf %37, %39 : vector<16x64xf32>
      %41 = arith.truncf %40 : vector<16x64xf32> to vector<16x64xbf16>
      %c0_25 = arith.constant 0 : index
      %c0_26 = arith.constant 0 : index
      %42 = vector.load %arg10[%c0_25, %c0_26] : memref<16x64xbf16, #tpu.memory_space<vmem>>, vector<16x64xbf16>
      tpu.vector_store %arg10[%c0_25, %c0_26], %41 {strides = array<i32>} : memref<16x64xbf16, #tpu.memory_space<vmem>>, vector<16x64xbf16>,
    } else {
    }
    %c0 = arith.constant 0 : index
    %c0_1 = arith.constant 0 : index
    %3 = vector.load %arg10[%c0, %c0_1] : memref<16x64xbf16, #tpu.memory_space<vmem>>, vector<16x64xbf16>
    %c0_2 = arith.constant 0 : index
    %c0_3 = arith.constant 0 : index
    %4 = vector.load %arg7[%c0_2, %c0_3] : memref<64x512xbf16, #tpu.memory_space<vmem>>, vector<64x512xbf16>
    %cst = arith.constant dense<0.000000e+00> : vector<16x512xf32>
    %5 = tpu.matmul %3, %4, %cst {dimension_numbers = #tpu.dot_dimension_numbers<[1], [0], [0], [1], [0, 0, 1, 1], [], []>} : vector<16x64xbf16>, vector<64x512xbf16>, vector<16x512xf32> -> vector<16x512xf32>
    %c0_4 = arith.constant 0 : index
    %c0_5 = arith.constant 0 : index
    %6 = vector.load %arg8[%c0_4, %c0_5] : memref<1x512xf32, #tpu.memory_space<vmem>>, vector<1x512xf32>
    %7 = vector.broadcast %6 : vector<1x512xf32> to vector<16x512xf32>
    %8 = arith.addf %5, %7 : vector<16x512xf32>
    %9 = arith.truncf %8 : vector<16x512xf32> to vector<16x512xbf16>
    %c0_6 = arith.constant 0 : index
    %c0_7 = arith.constant 0 : index
    %10 = vector.load %arg9[%c0_6, %c0_7] : memref<16x512xbf16, #tpu.memory_space<vmem>>, vector<16x512xbf16>
    tpu.vector_store %arg9[%c0_6, %c0_7], %9 {strides = array<i32>} : memref<16x512xbf16, #tpu.memory_space<vmem>>, vector<16x512xbf16>,
    return
  }
  func.func @transform_0(%arg0: i32, %arg1: i32) -> (i32, i32) {
    %c0_i32 = arith.constant 0 : i32
    %c0_i32_0 = arith.constant 0 : i32
    return %arg0, %c0_i32 : i32, i32
  }
  func.func @transform_1(%arg0: i32, %arg1: i32) -> (i32, i32) {
    %c0_i32 = arith.constant 0 : i32
    %c0_i32_0 = arith.constant 0 : i32
    %c0_i32_1 = arith.constant 0 : i32
    return %c0_i32, %c0_i32_0 : i32, i32
  }
  func.func @transform_2(%arg0: i32, %arg1: i32) -> (i32, i32) {
    %c0_i32 = arith.constant 0 : i32
    %c0_i32_0 = arith.constant 0 : i32
    %c0_i32_1 = arith.constant 0 : i32
    return %c0_i32, %c0_i32_0 : i32, i32
  }
  func.func @transform_3(%arg0: i32, %arg1: i32) -> (i32, i32) {
    %c0_i32 = arith.constant 0 : i32
    %c0_i32_0 = arith.constant 0 : i32
    %c0_i32_1 = arith.constant 0 : i32
    return %c0_i32, %c0_i32_0 : i32, i32
  }
  func.func @transform_4(%arg0: i32, %arg1: i32) -> (i32, i32) {
    %c0_i32 = arith.constant 0 : i32
    %c0_i32_0 = arith.constant 0 : i32
    %c0_i32_1 = arith.constant 0 : i32
    return %c0_i32, %c0_i32_0 : i32, i32
  }
  func.func @transform_5(%arg0: i32, %arg1: i32) -> (i32, i32) {
    %c0_i32 = arith.constant 0 : i32
    %c0_i32_0 = arith.constant 0 : i32
    return %c0_i32, %arg1 : i32, i32
  }
  func.func @transform_6(%arg0: i32, %arg1: i32) -> (i32, i32) {
    %c0_i32 = arith.constant 0 : i32
    %c0_i32_0 = arith.constant 0 : i32
    return %c0_i32, %arg1 : i32, i32
  }
  func.func @transform_7(%arg0: i32, %arg1: i32) -> (i32, i32) {
    %c0_i32 = arith.constant 0 : i32
    return %arg0, %arg1 : i32, i32
  }
}

</mosaic_0001>

<llo_original>
// kernel: tpu_custom_call.1
$region0: #{tpu_custom_call.1}
  #allocation0 [shape = 'u32[]', space=smem, size = 0x4, offset = 0x4, fixed_abs, tag = 'smem constant byte address 0x4 - core index']
  #allocation1 [shape = 'u32[144,128]{1,0:T(1,128)}', space=vmem, size = 0x12000, scoped, tag = 'internal scratch']
  #allocation2 [shape = 'bf16[16,64]{1,0:T(16,128)(2,1)}', space=vmem, size = 0x1000, scoped, tag = 'scratch operand']
  %s0 = inlined_call_operand.hbm [shape: bf16[32,64], index: 0, kind: input, shape index: {}]
  %s1 = inlined_call_operand.hbm [shape: bf16[64,64], index: 1, kind: input, shape index: {}]
  %s2 = inlined_call_operand.vmem [shape: f32[1,64], index: 2, kind: input, shape index: {}]
  %s3 = inlined_call_operand.vmem [shape: f32[1,64], index: 3, kind: input, shape index: {}]
  %s4 = inlined_call_operand.vmem [shape: f32[1,64], index: 4, kind: input, shape index: {}]
  %s5 = inlined_call_operand.hbm [shape: bf16[64,1024], index: 5, kind: input, shape index: {}]
  %s6 = inlined_call_operand.vmem [shape: f32[1,1024], index: 6, kind: input, shape index: {}]
  %s7 = inlined_call_operand.hbm [shape: bf16[32,1024], index: 7, kind: output, shape index: {}]
  %s8 = sld [smem:[#allocation0]]
  $region77: #{tpu_custom_call.1} parent=0
    _
  %s10 = ssub.s32 1, %s8
  %s11 = scalar_select 0, %s10, %s8
  $region1: #{tpu_custom_call.1} parent=0
    #allocation3 [shape = 'u8[8192]{0}', space=vmem, size = 0x2000, scoped, tag = 'input window, operand 0']
    #allocation4 [shape = 's32[2]{0}', space=sflag, size = 0x8, scoped, tag = 'scoped memory for tpu_custom_call.1']
    #allocation5 [shape = 's32[2]{0}', space=sflag, size = 0x8, scoped, tag = 'scoped memory for tpu_custom_call.1']
    #allocation6 [shape = 'u8[16384]{0}', space=vmem, size = 0x4000, scoped, tag = 'input window, operand 1, single buffered']
    #allocation7 [shape = 's32[1]{0}', space=sflag, size = 0x4, scoped, tag = 'scoped memory for tpu_custom_call.1']
    #allocation8 [shape = 'u8[131072]{0}', space=vmem, size = 0x20000, scoped, tag = 'input window, operand 5']
    #allocation9 [shape = 'u8[32768]{0}', space=vmem, size = 0x8000, scoped, tag = 'output window, operand 0']
    %12 = vsyncpa [#allocation4], 0
    %s13 = scalar_lea.sflag [#allocation4], 1
    %14 = vsyncpa %s13, 0
    %15 = vsyncpa [#allocation7], 0
    %16 = vsyncpa [#allocation5], 0
    %s17 = scalar_lea.sflag [#allocation5], 1
    %18 = vsyncpa %s17, 0
    loop: start=0, step=1, limit=6
    $region2: #{tpu_custom_call.1} parent=1 // loop_pre_header
      _
    $region3: #{tpu_custom_call.1} parent=1 // loop_header
      %s20 = sphi 0, %s24
      %p21 = scmp.ge.s32.totalorder %s20, 6
      %s27 = sphi 0, %s39
      %s28 = sphi 0, %s35
      %s29 = sphi 0, %s27
      %s30 = sphi 0, %s28
      %s31 = sphi 0, %s29
      %s32 = sphi 0, %s30
      %s42 = sphi 0, %s44
      %s45 = sphi 0, %s42
      %s46 = sphi 0, %s45
      %s62 = sphi 0, %s46
      %s66 = sphi 0, %s66
      %s68 = sphi 0, %s66
      %s69 = sphi 0, %s68
      %s83 = sphi 0, %s69
      %s87 = sphi 0, %s87
      %s89 = sphi 0, %s87
      %s90 = sphi 0, %s89
      %s104 = sphi 0, %s90
      %s108 = sphi 0, %s108
      %s110 = sphi 0, %s108
      %s111 = sphi 0, %s110
      %s125 = sphi 0, %s111
      %s129 = sphi 0, %s129
      %s131 = sphi 0, %s129
      %s132 = sphi 0, %s131
      %s146 = sphi 0, %s132
      %s152 = sphi 0, %s154
      %s155 = sphi 0, %s152
      %s156 = sphi 0, %s155
      %s172 = sphi 0, %s156
      %s178 = sphi 0, %s180
      %s181 = sphi 0, %s178
      %s182 = sphi 0, %s181
      %s198 = sphi 0, %s182
      %s206 = sphi 0, %s208
      %s209 = sphi 0, %s206
      %s210 = sphi 0, %s209
      %s226 = sphi 0, %s210
    $region4: #{tpu_custom_call.1} parent=1 // loop_header_branch
      %23 = sbr.rel (%p21) target = $region8
    $region5: #{tpu_custom_call.1} parent=1 // loop_body
      %s25 = ssub.s32 %s20, 1
      %s26 = ssub.s32 %s20, 2
      %s33 = sadd.s32 1, %s28
      %p34 = scmp.ge.s32.totalorder %s33, 2
      %s35 = scalar_select %p34, 0, %s33
      %s36 = sadd.s32 1, %s27
      %s37 = scalar_select %p34, %s36, %s27
      %p38 = scmp.ge.s32.totalorder %s37, 2
      %s39 = scalar_select %p38, 0, %s37
      %s40 = ssub.s32 %s27, %s39
      %p41 = scmp.eq.s32.totalorder %s40, 0
      %s43 = sadd.s32 %s42, 1
      %s44 = scalar_select %p41, %s42, %s43
      %p47 = pneg %p41
      %p48 = scmp.eq.s32.totalorder %s20, 3
      %p49 = por %p47, %p48
      %p50 = scmp.ne.s32.totalorder %s42, %s45
      %p51 = scmp.eq.s32.totalorder %s20, 0
      %p52 = por %p50, %p51
      %p53 = scmp.ne.s32.totalorder %s42, %s45
      %p54 = scmp.eq.s32.totalorder %s25, 3
      %p55 = por %p53, %p54
      %p56 = scmp.ne.s32.totalorder %s45, %s46
      %p57 = scmp.eq.s32.totalorder %s25, 0
      %p58 = por %p56, %p57
      %p59 = scmp.ne.s32.totalorder %s45, %s46
      %p60 = scmp.eq.s32.totalorder %s26, 3
      %p61 = por %p59, %p60
      %p63 = scmp.ne.s32.totalorder %s46, %s62
      %p64 = scmp.eq.s32.totalorder %s26, 0
      %p65 = por %p63, %p64
      %s67 = sadd.s32 %s66, 1
      %p70 = scmp.eq.s32.totalorder %s20, 3
      %p71 = scmp.ne.s32.totalorder %s66, %s68
      %p72 = scmp.eq.s32.totalorder %s20, 0
      %p73 = por %p71, %p72
      %p74 = scmp.ne.s32.totalorder %s66, %s68
      %p75 = scmp.eq.s32.totalorder %s25, 3
      %p76 = por %p74, %p75
      %p77 = scmp.ne.s32.totalorder %s68, %s69
      %p78 = scmp.eq.s32.totalorder %s25, 0
      %p79 = por %p77, %p78
      %p80 = scmp.ne.s32.totalorder %s68, %s69
      %p81 = scmp.eq.s32.totalorder %s26, 3
      %p82 = por %p80, %p81
      %p84 = scmp.ne.s32.totalorder %s69, %s83
      %p85 = scmp.eq.s32.totalorder %s26, 0
      %p86 = por %p84, %p85
      %s88 = sadd.s32 %s87, 1
      %p91 = scmp.eq.s32.totalorder %s20, 3
      %p92 = scmp.ne.s32.totalorder %s87, %s89
      %p93 = scmp.eq.s32.totalorder %s20, 0
      %p94 = por %p92, %p93
      %p95 = scmp.ne.s32.totalorder %s87, %s89
      %p96 = scmp.eq.s32.totalorder %s25, 3
      %p97 = por %p95, %p96
      %p98 = scmp.ne.s32.totalorder %s89, %s90
      %p99 = scmp.eq.s32.totalorder %s25, 0
      %p100 = por %p98, %p99
      %p101 = scmp.ne.s32.totalorder %s89, %s90
      %p102 = scmp.eq.s32.totalorder %s26, 3
      %p103 = por %p101, %p102
      %p105 = scmp.ne.s32.totalorder %s90, %s104
      %p106 = scmp.eq.s32.totalorder %s26, 0
      %p107 = por %p105, %p106
      %s109 = sadd.s32 %s108, 1
      %p112 = scmp.eq.s32.totalorder %s20, 3
      %p113 = scmp.ne.s32.totalorder %s108, %s110
      %p114 = scmp.eq.s32.totalorder %s20, 0
      %p115 = por %p113, %p114
      %p116 = scmp.ne.s32.totalorder %s108, %s110
      %p117 = scmp.eq.s32.totalorder %s25, 3
      %p118 = por %p116, %p117
      %p119 = scmp.ne.s32.totalorder %s110, %s111
      %p120 = scmp.eq.s32.totalorder %s25, 0
      %p121 = por %p119, %p120
      %p122 = scmp.ne.s32.totalorder %s110, %s111
      %p123 = scmp.eq.s32.totalorder %s26, 3
      %p124 = por %p122, %p123
      %p126 = scmp.ne.s32.totalorder %s111, %s125
      %p127 = scmp.eq.s32.totalorder %s26, 0
      %p128 = por %p126, %p127
      %s130 = sadd.s32 %s129, 1
      %p133 = scmp.eq.s32.totalorder %s20, 3
      %p134 = scmp.ne.s32.totalorder %s129, %s131
      %p135 = scmp.eq.s32.totalorder %s20, 0
      %p136 = por %p134, %p135
      %p137 = scmp.ne.s32.totalorder %s129, %s131
      %p138 = scmp.eq.s32.totalorder %s25, 3
      %p139 = por %p137, %p138
      %p140 = scmp.ne.s32.totalorder %s131, %s132
      %p141 = scmp.eq.s32.totalorder %s25, 0
      %p142 = por %p140, %p141
      %p143 = scmp.ne.s32.totalorder %s131, %s132
      %p144 = scmp.eq.s32.totalorder %s26, 3
      %p145 = por %p143, %p144
      %p147 = scmp.ne.s32.totalorder %s132, %s146
      %p148 = scmp.eq.s32.totalorder %s26, 0
      %p149 = por %p147, %p148
      %s150 = ssub.s32 %s28, %s35
      %p151 = scmp.eq.s32.totalorder %s150, 0
      %s153 = sadd.s32 %s152, 1
      %s154 = scalar_select %p151, %s152, %s153
      %p157 = pneg %p151
      %p158 = scmp.eq.s32.totalorder %s20, 3
      %p159 = por %p157, %p158
      %p160 = scmp.ne.s32.totalorder %s152, %s155
      %p161 = scmp.eq.s32.totalorder %s20, 0
      %p162 = por %p160, %p161
      %p163 = scmp.ne.s32.totalorder %s152, %s155
      %p164 = scmp.eq.s32.totalorder %s25, 3
      %p165 = por %p163, %p164
      %p166 = scmp.ne.s32.totalorder %s155, %s156
      %p167 = scmp.eq.s32.totalorder %s25, 0
      %p168 = por %p166, %p167
      %p169 = scmp.ne.s32.totalorder %s155, %s156
      %p170 = scmp.eq.s32.totalorder %s26, 3
      %p171 = por %p169, %p170
      %p173 = scmp.ne.s32.totalorder %s156, %s172
      %p174 = scmp.eq.s32.totalorder %s26, 0
      %p175 = por %p173, %p174
      %s176 = ssub.s32 %s28, %s35
      %p177 = scmp.eq.s32.totalorder %s176, 0
      %s179 = sadd.s32 %s178, 1
      %s180 = scalar_select %p177, %s178, %s179
      %p183 = pneg %p177
      %p184 = scmp.eq.s32.totalorder %s20, 3
      %p185 = por %p183, %p184
      %p186 = scmp.ne.s32.totalorder %s178, %s181
      %p187 = scmp.eq.s32.totalorder %s20, 0
      %p188 = por %p186, %p187
      %p189 = scmp.ne.s32.totalorder %s178, %s181
      %p190 = scmp.eq.s32.totalorder %s25, 3
      %p191 = por %p189, %p190
      %p192 = scmp.ne.s32.totalorder %s181, %s182
      %p193 = scmp.eq.s32.totalorder %s25, 0
      %p194 = por %p192, %p193
      %p195 = scmp.ne.s32.totalorder %s181, %s182
      %p196 = scmp.eq.s32.totalorder %s26, 3
      %p197 = por %p195, %p196
      %p199 = scmp.ne.s32.totalorder %s182, %s198
      %p200 = scmp.eq.s32.totalorder %s26, 0
      %p201 = por %p199, %p200
      %s202 = ssub.s32 %s27, %s39
      %s203 = ssub.s32 %s28, %s35
      %s204 = sor.u32 %s202, %s203
      %p205 = scmp.eq.s32.totalorder %s204, 0
      %s207 = sadd.s32 %s206, 1
      %s208 = scalar_select %p205, %s206, %s207
      %p211 = pneg %p205
      %p212 = scmp.eq.s32.totalorder %s20, 3
      %p213 = por %p211, %p212
      %p214 = scmp.ne.s32.totalorder %s206, %s209
      %p215 = scmp.eq.s32.totalorder %s20, 0
      %p216 = por %p214, %p215
      %p217 = scmp.ne.s32.totalorder %s206, %s209
      %p218 = scmp.eq.s32.totalorder %s25, 3
      %p219 = por %p217, %p218
      %p220 = scmp.ne.s32.totalorder %s209, %s210
      %p221 = scmp.eq.s32.totalorder %s25, 0
      %p222 = por %p220, %p221
      %p223 = scmp.ne.s32.totalorder %s209, %s210
      %p224 = scmp.eq.s32.totalorder %s26, 3
      %p225 = por %p223, %p224
      %p227 = scmp.ne.s32.totalorder %s210, %s226
      %p228 = scmp.eq.s32.totalorder %s26, 0
      %p229 = por %p227, %p228
      %p230 = scmp.le.s32.totalorder 1, %s20
      %p231 = scmp.lt.s32.totalorder %s20, 5
      %p232 = pnand %p230, %p231
      %p233 = pneg %p232
      // Predicated region
      $region9: #{tpu_custom_call.1} parent=5 // pred_check
        _
      $region10: #{tpu_custom_call.1} parent=5 // pred_check_branch
        %235 = sbr.rel (%p232) target = $region12
      $region11: #{tpu_custom_call.1} parent=5 // pred_region
        %s236 = ssub.s32 %s20, 1
        // Predicated region
        $region13: #{tpu_custom_call.1} parent=11 // pred_check
          %p237 = pneg %p79
        $region14: #{tpu_custom_call.1} parent=11 // pred_check_branch
          %239 = sbr.rel (%p237) target = $region16
        $region15: #{tpu_custom_call.1} parent=11 // pred_region
          %s241 = ssub.s32 512, 512
          %242 = vsyncadd [#allocation7], %s241
          %s243 = sshll.u32 [#allocation6], 4
          %s244 = int_to_ptr.vmem [resolvable:$true] %s243
          %249 = dma.hbm_to_vmem [thread:$0]  %s1, 512, %s244, [#allocation7], 64, 64, 4
        $region16: #{tpu_custom_call.1} parent=11 // pred_fallthru
          _
        // Predicated region
        $region17: #{tpu_custom_call.1} parent=11 // pred_check
          %p250 = pneg %p100
        $region18: #{tpu_custom_call.1} parent=11 // pred_check_branch
          %252 = sbr.rel (%p250) target = $region20
        $region19: #{tpu_custom_call.1} parent=11 // pred_region
          _
        $region20: #{tpu_custom_call.1} parent=11 // pred_fallthru
          _
        // Predicated region
        $region21: #{tpu_custom_call.1} parent=11 // pred_check
          %p253 = pneg %p121
        $region22: #{tpu_custom_call.1} parent=11 // pred_check_branch
          %255 = sbr.rel (%p253) target = $region24
        $region23: #{tpu_custom_call.1} parent=11 // pred_region
          _
        $region24: #{tpu_custom_call.1} parent=11 // pred_fallthru
          _
        // Predicated region
        $region25: #{tpu_custom_call.1} parent=11 // pred_check
          %p256 = pneg %p142
        $region26: #{tpu_custom_call.1} parent=11 // pred_check_branch
          %258 = sbr.rel (%p256) target = $region28
        $region27: #{tpu_custom_call.1} parent=11 // pred_region
          _
        $region28: #{tpu_custom_call.1} parent=11 // pred_fallthru
          _
      $region12: #{tpu_custom_call.1} parent=5 // pred_fallthru
        _
      %p259 = scmp.lt.s32.totalorder %s20, 4
      // Predicated region
      $region29: #{tpu_custom_call.1} parent=5 // pred_check
        %p260 = pneg %p259
      $region30: #{tpu_custom_call.1} parent=5 // pred_check_branch
        %262 = sbr.rel (%p260) target = $region32
      $region31: #{tpu_custom_call.1} parent=5 // pred_region
        // Predicated region
        $region33: #{tpu_custom_call.1} parent=31 // pred_check
          %p263 = pneg %p52
        $region34: #{tpu_custom_call.1} parent=31 // pred_check_branch
          %265 = sbr.rel (%p263) target = $region36
        $region35: #{tpu_custom_call.1} parent=31 // pred_region
          %s266 = sand.u32 %s20, 1
          %s267 = scalar_lea.sflag [#allocation4], %s266
          %s268 = sand.u32 %s42, 1
          %s269 = smul.addr %s268, 8
          %s270 = scalar_lea.vmem [#allocation3], %s269
          %s271 = smul.u32 2, %s27
          %s273 = ssub.s32 128, 128
          %274 = vsyncadd %s267, %s273
          %s275 = smul.addr %s271, 64
          %s276 = scalar_lea.hbm %s0, %s275
          %s277 = sshll.u32 %s270, 4
          %s278 = int_to_ptr.vmem [resolvable:$true] %s277
          %283 = dma.hbm_to_vmem [thread:$0]  %s276, 128, %s278, %s267, 64, 64, 4
        $region36: #{tpu_custom_call.1} parent=31 // pred_fallthru
          _
        // Predicated region
        $region37: #{tpu_custom_call.1} parent=31 // pred_check
          %p284 = pneg %p162
        $region38: #{tpu_custom_call.1} parent=31 // pred_check_branch
          %286 = sbr.rel (%p284) target = $region40
        $region39: #{tpu_custom_call.1} parent=31 // pred_region
          %s287 = sand.u32 %s20, 1
          %s288 = scalar_lea.sflag [#allocation4], %s287
          %s289 = sand.u32 %s152, 1
          %s290 = smul.addr %s289, 128
          %s291 = scalar_lea.vmem [#allocation8], %s290
          %s292 = smul.u32 4, %s28
          %s294 = ssub.s32 2048, 2048
          %295 = vsyncadd %s288, %s294
          %s296 = smul.addr %s292, 64
          %s297 = scalar_lea.hbm %s5, %s296
          %s298 = sshll.u32 %s291, 4
          %s299 = int_to_ptr.vmem [resolvable:$true] %s298
          %304 = dma.hbm_to_vmem [thread:$0]  %s297, 2048, %s299, %s288, 512, 256, 16
        $region40: #{tpu_custom_call.1} parent=31 // pred_fallthru
          _
        // Predicated region
        $region41: #{tpu_custom_call.1} parent=31 // pred_check
          %p305 = pneg %p188
        $region42: #{tpu_custom_call.1} parent=31 // pred_check_branch
          %307 = sbr.rel (%p305) target = $region44
        $region43: #{tpu_custom_call.1} parent=31 // pred_region
          %s308 = smul.u32 4, %s28
          %p309 = scmp.lt.s32.totalorder %s308, 7
          %s310 = scalar_select %p309, %s308, 7
          %s311 = scalar_lea.vmem %s6, %s310
          %s312 = smul.u32 4, %s28
        $region44: #{tpu_custom_call.1} parent=31 // pred_fallthru
          _
      $region32: #{tpu_custom_call.1} parent=5 // pred_fallthru
        _
      %p313 = scmp.le.s32.totalorder 1, %s20
      %p314 = scmp.lt.s32.totalorder %s20, 5
      %p315 = pnand %p313, %p314
      %p316 = pneg %p315
      // Predicated region
      $region45: #{tpu_custom_call.1} parent=5 // pred_check
        _
      $region46: #{tpu_custom_call.1} parent=5 // pred_check_branch
        %318 = sbr.rel (%p315) target = $region48
      $region47: #{tpu_custom_call.1} parent=5 // pred_region
        %s319 = ssub.s32 %s20, 1
        %s320 = sand.u32 %s25, 1
        %s321 = scalar_lea.sflag [#allocation4], %s320
        %s322 = sand.u32 %s45, 1
        %s323 = smul.addr %s322, 8
        %s324 = scalar_lea.vmem [#allocation3], %s323
        // Predicated region
        $region49: #{tpu_custom_call.1} parent=47 // pred_check
          %p325 = pneg %p58
        $region50: #{tpu_custom_call.1} parent=47 // pred_check_branch
          %327 = sbr.rel (%p325) target = $region52
        $region51: #{tpu_custom_call.1} parent=47 // pred_region
          %328 = dma.done %s321, 128
        $region52: #{tpu_custom_call.1} parent=47 // pred_fallthru
          _
        // Predicated region
        $region53: #{tpu_custom_call.1} parent=47 // pred_check
          %p329 = pneg %p79
        $region54: #{tpu_custom_call.1} parent=47 // pred_check_branch
          %331 = sbr.rel (%p329) target = $region56
        $region55: #{tpu_custom_call.1} parent=47 // pred_region
          %332 = dma.done [#allocation7], 512
        $region56: #{tpu_custom_call.1} parent=47 // pred_fallthru
          _
        %s333 = sand.u32 %s25, 1
        %s334 = scalar_lea.sflag [#allocation4], %s333
        %s335 = sand.u32 %s155, 1
        %s336 = smul.addr %s335, 128
        %s337 = scalar_lea.vmem [#allocation8], %s336
        // Predicated region
        $region57: #{tpu_custom_call.1} parent=47 // pred_check
          %p338 = pneg %p168
        $region58: #{tpu_custom_call.1} parent=47 // pred_check_branch
          %340 = sbr.rel (%p338) target = $region60
        $region59: #{tpu_custom_call.1} parent=47 // pred_region
          %341 = dma.done %s334, 2048
        $region60: #{tpu_custom_call.1} parent=47 // pred_fallthru
          _
        %s342 = sand.u32 %s25, 1
        %s343 = scalar_lea.sflag [#allocation4], %s342
        %s344 = sand.u32 %s45, 1
        %s345 = smul.addr %s344, 8
        %s346 = scalar_lea.vmem [#allocation3], %s345
        %p347 = pneg %p58
        %p348 = pneg %p55
        %p349 = pneg %p79
        %p350 = pneg %p76
        %p351 = pneg %p100
        %p352 = pneg %p97
        %p353 = pneg %p121
        %p354 = pneg %p118
        %p355 = pneg %p142
        %p356 = pneg %p139
        %s357 = sand.u32 %s25, 1
        %s358 = scalar_lea.sflag [#allocation4], %s357
        %s359 = sand.u32 %s155, 1
        %s360 = smul.addr %s359, 128
        %s361 = scalar_lea.vmem [#allocation8], %s360
        %p362 = pneg %p168
        %p363 = pneg %p165
        %s364 = smul.u32 4, %s30
        %p365 = scmp.lt.s32.totalorder %s364, 7
        %s366 = scalar_select %p365, %s364, 7
        %s367 = scalar_lea.vmem %s6, %s366
        %p368 = pneg %p194
        %p369 = pneg %p191
        %p370 = pneg %p222
        %p371 = pneg %p219
        %s372 = sand.u32 %s209, 1
        %s373 = scalar_lea.sflag [#allocation5], %s372
        %s374 = sand.u32 %s209, 1
        %s375 = smul.addr %s374, 32
        %s376 = scalar_lea.vmem [#allocation9], %s375
        %s377 = smul.u32 2, %s29
        %s378 = smul.u32 4, %s30
        %s379 = smul.u32 4, %s30
        %p380 = scmp.lt.s32.totalorder %s379, 7
        %s381 = scalar_select %p380, %s379, 7
        %s382 = scalar_lea.vmem %s6, %s381
        %s383 = smul.u32 4, %s30
        %s384 = smul.u32 2, %s29
        %s385 = smul.u32 4, %s30
        %p387 = scmp.eq.s32.totalorder %s30, 0
        // Predicated region
        $region61: #{tpu_custom_call.1} parent=47 // pred_check
          %p388 = pneg %p387
        $region62: #{tpu_custom_call.1} parent=47 // pred_check_branch
          %390 = sbr.rel (%p388) target = $region64
        $region63: #{tpu_custom_call.1} parent=47 // pred_region
          %v391 = vld [vmem:[%s324] sm:$0xf]
          %v392 = vld [vmem:[%s324 + $0x4] sm:$0xf]
          %v393 = vld [vmem:[#allocation6] sm:$0xf]
          %v394 = vld [vmem:[#allocation6 + $0x4] sm:$0xf]
          %v395 = vld [vmem:[#allocation6 + $0x8] sm:$0xf]
          %v396 = vld [vmem:[#allocation6 + $0xc] sm:$0xf]
          %v397 = vld [vmem:[#allocation6 + $0x10] sm:$0xf]
          %v398 = vld [vmem:[#allocation6 + $0x14] sm:$0xf]
          %v399 = vld [vmem:[#allocation6 + $0x18] sm:$0xf]
          %v400 = vld [vmem:[#allocation6 + $0x1c] sm:$0xf]
          %v401 = vld [vmem:[%s2] sm:$0x1]
          %v403 = vlaneseq
          %v404 = vshrl.u32 %v403, 7
          %v405 = vsub.s32 0, %v404
          %v406 = vrot.slane %v401, %v405
          %v410 = vunpack.c.l.b16 %v391
          %v411 = vunpack.c.l.b16 %v392
          %v412 = vpack.c.b16 %v411, %v410
          %v421 = vunpack.c.l.b16 %v393
          %v422 = vunpack.c.l.b16 %v394
          %v423 = vunpack.c.l.b16 %v395
          %v424 = vunpack.c.l.b16 %v396
          %v425 = vunpack.c.l.b16 %v397
          %v426 = vunpack.c.l.b16 %v398
          %v427 = vunpack.c.l.b16 %v399
          %v428 = vunpack.c.l.b16 %v400
          %v429 = vpack.c.b16 %v422, %v421
          %v430 = vpack.c.b16 %v424, %v423
          %v431 = vpack.c.b16 %v426, %v425
          %v432 = vpack.c.b16 %v428, %v427
          %vm437 = vcmask 523264
          %v439 = vsel %vm437, %v412, 0
          %441 = vmatprep.subr.bf16.mxu0 0
          %442 = vmatpush1.bf16.msra.mxu0 %v429
          %443 = vmatprep.subr.bf16.mxu0 0
          %444 = vmatpush1.bf16.msra.mxu0 %v430
          %445 = vmatprep.subr.bf16.mxu0 0
          %446 = vmatpush1.bf16.msra.mxu0 %v431
          %447 = vmatprep.subr.bf16.mxu0 0
          %448 = vmatpush1.bf16.msra.mxu0 %v432
          %449 = vmatprep.subr.bf16.mxu0 0
          %450 = vmatpush1.bf16.msra.mxu0 0
          %451 = vmatprep.subr.bf16.mxu0 0
          %452 = vmatpush1.bf16.msra.mxu0 0
          %453 = vmatprep.subr.bf16.mxu0 0
          %454 = vmatpush1.bf16.msra.mxu0 0
          %455 = vmatprep.subr.bf16.mxu0 0
          %456 = vmatpush1.bf16.msra.mxu0 0
          %457 = vmatprep.subr.bf16.mxu0 0
          %458 = vmatpush1.bf16.msra.mxu0 0
          %459 = vmatprep.subr.bf16.mxu0 0
          %460 = vmatpush1.bf16.msra.mxu0 0
          %461 = vmatprep.subr.bf16.mxu0 0
          %462 = vmatpush1.bf16.msra.mxu0 0
          %463 = vmatprep.subr.bf16.mxu0 0
          %464 = vmatpush1.bf16.msra.mxu0 0
          %465 = vmatprep.subr.bf16.mxu0 0
          %466 = vmatpush1.bf16.msra.mxu0 0
          %467 = vmatprep.subr.bf16.mxu0 0
          %468 = vmatpush1.bf16.msra.mxu0 0
          %469 = vmatprep.subr.bf16.mxu0 0
          %470 = vmatpush1.bf16.msra.mxu0 0
          %471 = vmatprep.subr.bf16.mxu0 0
          %472 = vmatpush1.bf16.msra.mxu0 0
          %473 = vmatprep.mubr.bf16.mxu0 0
          %474 = vmatmul.mubr.bf16.gmra.mrb[0].mxu0 %v439
          %v475 = vpop.f32.mrb[0].mxu0
          %v476 = vadd.f32 %v406, %v475
          %v477 = vpop.f32.mrb[0].mxu0
          %v478 = vpop.f32.mrb[0].mxu0
          %v479 = vadd.f32 %v406, %v478
          %v480 = vpop.f32.mrb[0].mxu0
          %481 = vdwg.mxu0
          %v482 = vmax.f32 %v476, 0.0
          %v483 = vmax.f32 %v479, 0.0
          %v484 = vsel %vm437, %v482, 0.0
          %485 = vadd.xlane.f32.xlu0 %v484
          %v486 = vpop.xlane.xlu0 %485
          %v487 = vsel %vm437, %v483, 0.0
          %488 = vadd.xlane.f32.xlu0 %v487
          %v489 = vpop.xlane.xlu0 %488
          %v490 = vrcp.pop 64.0
          %v491 = vmul.f32 %v486, %v490
          %v492 = vmul.f32 %v489, %v490
          %v493 = vsub.f32 %v482, %v491
          %v494 = vsub.f32 %v483, %v492
          %v495 = vmul.f32 %v493, %v493
          %v496 = vmul.f32 %v494, %v494
          %v497 = vsel %vm437, %v495, 0.0
          %498 = vadd.xlane.f32.xlu0 %v497
          %v499 = vpop.xlane.xlu0 %498
          %v500 = vsel %vm437, %v496, 0.0
          %501 = vadd.xlane.f32.xlu0 %v500
          %v502 = vpop.xlane.xlu0 %501
          %v503 = vmul.f32 %v499, %v490
          %v504 = vmul.f32 %v502, %v490
          %v505 = vadd.f32 %v503, 1e-05
          %v506 = vadd.f32 %v504, 1e-05
          %v507 = vrsqrt.pop %v505
          %v508 = vrsqrt.pop %v506
          %v509 = vmul.f32 %v493, %v507
          %v510 = vmul.f32 %v494, %v508
          %v511 = vld [vmem:[%s3] sm:$0x1]
          %v513 = vlaneseq
          %v514 = vshrl.u32 %v513, 7
          %v515 = vsub.s32 0, %v514
          %v516 = vrot.slane %v511, %v515
          %v518 = vmul.f32 %v509, %v516
          %v519 = vmul.f32 %v510, %v516
          %v520 = vld [vmem:[%s4] sm:$0x1]
          %v522 = vlaneseq
          %v523 = vshrl.u32 %v522, 7
          %v524 = vsub.s32 0, %v523
          %v525 = vrot.slane %v520, %v524
          %v527 = vadd.f32 %v518, %v525
          %v528 = vadd.f32 %v519, %v525
          %v529 = vpack.c.bf16 %v528, %v527
          %530 = vst.msk [vmem:[#allocation2] sm:$0xff] %vm437, %v529
        $region64: #{tpu_custom_call.1} parent=47 // pred_fallthru
          _
        %v531 = vld [vmem:[#allocation2] sm:$0xff]
        %v532 = vld [vmem:[%s337] sm:$0xff]
        %v533 = vld [vmem:[%s337 + $0x8] sm:$0xff]
        %v534 = vld [vmem:[%s337 + $0x10] sm:$0xff]
        %v535 = vld [vmem:[%s337 + $0x18] sm:$0xff]
        %v536 = vld [vmem:[%s337 + $0x20] sm:$0xff]
        %v537 = vld [vmem:[%s337 + $0x28] sm:$0xff]
        %v538 = vld [vmem:[%s337 + $0x30] sm:$0xff]
        %v539 = vld [vmem:[%s337 + $0x38] sm:$0xff]
        %v540 = vld [vmem:[%s337 + $0x40] sm:$0xff]
        %v541 = vld [vmem:[%s337 + $0x48] sm:$0xff]
        %v542 = vld [vmem:[%s337 + $0x50] sm:$0xff]
        %v543 = vld [vmem:[%s337 + $0x58] sm:$0xff]
        %v544 = vld [vmem:[%s337 + $0x60] sm:$0xff]
        %v545 = vld [vmem:[%s337 + $0x68] sm:$0xff]
        %v546 = vld [vmem:[%s337 + $0x70] sm:$0xff]
        %v547 = vld [vmem:[%s337 + $0x78] sm:$0xff]
        %v548 = vld [vmem:[%s382] sm:$0xf]
        %v550 = vlaneseq
        %v551 = vshrl.u32 %v550, 7
        %v552 = vsub.s32 0, %v551
        %v553 = vrot.slane %v548, %v552
        %v554 = vlaneseq
        %v555 = vshrl.u32 %v554, 7
        %v556 = vsub.s32 1, %v555
        %v557 = vrot.slane %v548, %v556
        %v558 = vlaneseq
        %v559 = vshrl.u32 %v558, 7
        %v560 = vsub.s32 2, %v559
        %v561 = vrot.slane %v548, %v560
        %v562 = vlaneseq
        %v563 = vshrl.u32 %v562, 7
        %v564 = vsub.s32 3, %v563
        %v565 = vrot.slane %v548, %v564
        %v586 = vunpack.c.l.b16 %v532
        %v587 = vunpack.c.h.b16 %v532
        %v588 = vunpack.c.l.b16 %v533
        %v589 = vunpack.c.h.b16 %v533
        %v590 = vunpack.c.l.b16 %v534
        %v591 = vunpack.c.h.b16 %v534
        %v592 = vunpack.c.l.b16 %v535
        %v593 = vunpack.c.h.b16 %v535
        %v594 = vunpack.c.l.b16 %v536
        %v595 = vunpack.c.h.b16 %v536
        %v596 = vunpack.c.l.b16 %v537
        %v597 = vunpack.c.h.b16 %v537
        %v598 = vunpack.c.l.b16 %v538
        %v599 = vunpack.c.h.b16 %v538
        %v600 = vunpack.c.l.b16 %v539
        %v601 = vunpack.c.h.b16 %v539
        %v602 = vunpack.c.l.b16 %v540
        %v603 = vunpack.c.h.b16 %v540
        %v604 = vunpack.c.l.b16 %v541
        %v605 = vunpack.c.h.b16 %v541
        %v606 = vunpack.c.l.b16 %v542
        %v607 = vunpack.c.h.b16 %v542
        %v608 = vunpack.c.l.b16 %v543
        %v609 = vunpack.c.h.b16 %v543
        %v610 = vunpack.c.l.b16 %v544
        %v611 = vunpack.c.h.b16 %v544
        %v612 = vunpack.c.l.b16 %v545
        %v613 = vunpack.c.h.b16 %v545
        %v614 = vunpack.c.l.b16 %v546
        %v615 = vunpack.c.h.b16 %v546
        %v616 = vunpack.c.l.b16 %v547
        %v617 = vunpack.c.h.b16 %v547
        %v618 = vpack.c.b16 %v590, %v586
        %v619 = vpack.c.b16 %v591, %v587
        %v620 = vpack.c.b16 %v592, %v588
        %v621 = vpack.c.b16 %v593, %v589
        %v622 = vpack.c.b16 %v598, %v594
        %v623 = vpack.c.b16 %v599, %v595
        %v624 = vpack.c.b16 %v600, %v596
        %v625 = vpack.c.b16 %v601, %v597
        %v626 = vpack.c.b16 %v606, %v602
        %v627 = vpack.c.b16 %v607, %v603
        %v628 = vpack.c.b16 %v608, %v604
        %v629 = vpack.c.b16 %v609, %v605
        %v630 = vpack.c.b16 %v614, %v610
        %v631 = vpack.c.b16 %v615, %v611
        %v632 = vpack.c.b16 %v616, %v612
        %v633 = vpack.c.b16 %v617, %v613
        %vm650 = vcmask 523264
        %v652 = vsel %vm650, %v531, 0
        %654 = vmatprep.subr.bf16.mxu0 %v619
        %655 = vmatpush1.bf16.msra.mxu0 %v618
        %656 = vmatprep.subr.bf16.mxu0 %v623
        %657 = vmatpush1.bf16.msra.mxu0 %v622
        %658 = vmatprep.subr.bf16.mxu0 %v627
        %659 = vmatpush1.bf16.msra.mxu0 %v626
        %660 = vmatprep.subr.bf16.mxu0 %v631
        %661 = vmatpush1.bf16.msra.mxu0 %v630
        %662 = vmatprep.subr.bf16.mxu0 0
        %663 = vmatpush1.bf16.msra.mxu0 0
        %664 = vmatprep.subr.bf16.mxu0 0
        %665 = vmatpush1.bf16.msra.mxu0 0
        %666 = vmatprep.subr.bf16.mxu0 0
        %667 = vmatpush1.bf16.msra.mxu0 0
        %668 = vmatprep.subr.bf16.mxu0 0
        %669 = vmatpush1.bf16.msra.mxu0 0
        %670 = vmatprep.subr.bf16.mxu0 0
        %671 = vmatpush1.bf16.msra.mxu0 0
        %672 = vmatprep.subr.bf16.mxu0 0
        %673 = vmatpush1.bf16.msra.mxu0 0
        %674 = vmatprep.subr.bf16.mxu0 0
        %675 = vmatpush1.bf16.msra.mxu0 0
        %676 = vmatprep.subr.bf16.mxu0 0
        %677 = vmatpush1.bf16.msra.mxu0 0
        %678 = vmatprep.subr.bf16.mxu0 0
        %679 = vmatpush1.bf16.msra.mxu0 0
        %680 = vmatprep.subr.bf16.mxu0 0
        %681 = vmatpush1.bf16.msra.mxu0 0
        %682 = vmatprep.subr.bf16.mxu0 0
        %683 = vmatpush1.bf16.msra.mxu0 0
        %684 = vmatprep.subr.bf16.mxu0 0
        %685 = vmatpush1.bf16.msra.mxu0 0
        %686 = vmatprep.mubr.bf16.mxu0 0
        %687 = vmatmul.mubr.bf16.gmra.mrb[0].mxu0 %v652
        %v688 = vpop.f32.mrb[0].mxu0
        %v689 = vadd.f32 %v553, %v688
        %v690 = vpop.f32.mrb[0].mxu0
        %v691 = vadd.f32 %v557, %v690
        %v692 = vpop.f32.mrb[0].mxu0
        %v693 = vadd.f32 %v553, %v692
        %v694 = vpop.f32.mrb[0].mxu0
        %v695 = vadd.f32 %v557, %v694
        %696 = vdwg.mxu0
        %697 = vmatprep.subr.bf16.mxu0 %v621
        %698 = vmatpush1.bf16.msra.mxu0 %v620
        %699 = vmatprep.subr.bf16.mxu0 %v625
        %700 = vmatpush1.bf16.msra.mxu0 %v624
        %701 = vmatprep.subr.bf16.mxu0 %v629
        %702 = vmatpush1.bf16.msra.mxu0 %v628
        %703 = vmatprep.subr.bf16.mxu0 %v633
        %704 = vmatpush1.bf16.msra.mxu0 %v632
        %705 = vmatprep.subr.bf16.mxu0 0
        %706 = vmatpush1.bf16.msra.mxu0 0
        %707 = vmatprep.subr.bf16.mxu0 0
        %708 = vmatpush1.bf16.msra.mxu0 0
        %709 = vmatprep.subr.bf16.mxu0 0
        %710 = vmatpush1.bf16.msra.mxu0 0
        %711 = vmatprep.subr.bf16.mxu0 0
        %712 = vmatpush1.bf16.msra.mxu0 0
        %713 = vmatprep.subr.bf16.mxu0 0
        %714 = vmatpush1.bf16.msra.mxu0 0
        %715 = vmatprep.subr.bf16.mxu0 0
        %716 = vmatpush1.bf16.msra.mxu0 0
        %717 = vmatprep.subr.bf16.mxu0 0
        %718 = vmatpush1.bf16.msra.mxu0 0
        %719 = vmatprep.subr.bf16.mxu0 0
        %720 = vmatpush1.bf16.msra.mxu0 0
        %721 = vmatprep.subr.bf16.mxu0 0
        %722 = vmatpush1.bf16.msra.mxu0 0
        %723 = vmatprep.subr.bf16.mxu0 0
        %724 = vmatpush1.bf16.msra.mxu0 0
        %725 = vmatprep.subr.bf16.mxu0 0
        %726 = vmatpush1.bf16.msra.mxu0 0
        %727 = vmatprep.subr.bf16.mxu0 0
        %728 = vmatpush1.bf16.msra.mxu0 0
        %729 = vmatprep.mubr.bf16.mxu0 0
        %730 = vmatmul.mubr.bf16.gmra.mrb[0].mxu0 %v652
        %v731 = vpop.f32.mrb[0].mxu0
        %v732 = vadd.f32 %v561, %v731
        %v733 = vpop.f32.mrb[0].mxu0
        %v734 = vadd.f32 %v565, %v733
        %v735 = vpop.f32.mrb[0].mxu0
        %v736 = vadd.f32 %v561, %v735
        %v737 = vpop.f32.mrb[0].mxu0
        %v738 = vadd.f32 %v565, %v737
        %739 = vdwg.mxu0
        %v740 = vpack.c.bf16 %v693, %v689
        %v741 = vpack.c.bf16 %v695, %v691
        %v742 = vpack.c.bf16 %v736, %v732
        %v743 = vpack.c.bf16 %v738, %v734
        %v748 = vunpack.c.l.b16 %v740
        %v749 = vunpack.c.l.b16 %v741
        %v750 = vunpack.c.l.b16 %v742
        %v751 = vunpack.c.l.b16 %v743
        %v752 = vunpack.c.h.b16 %v740
        %v753 = vunpack.c.h.b16 %v741
        %v754 = vunpack.c.h.b16 %v742
        %v755 = vunpack.c.h.b16 %v743
        %v756 = vpack.c.b16 %v749, %v748
        %v757 = vpack.c.b16 %v751, %v750
        %v758 = vpack.c.b16 %v753, %v752
        %v759 = vpack.c.b16 %v755, %v754
        %764 = vst [vmem:[%s376] sm:$0xff] %v756
        %765 = vst [vmem:[%s376 + $0x8] sm:$0xff] %v757
        %766 = vst [vmem:[%s376 + $0x10] sm:$0xff] %v758
        %767 = vst [vmem:[%s376 + $0x18] sm:$0xff] %v759
        %s768 = sand.u32 %s209, 1
        %s769 = scalar_lea.sflag [#allocation5], %s768
        %s770 = sand.u32 %s209, 1
        %s771 = smul.addr %s770, 32
        %s772 = scalar_lea.vmem [#allocation9], %s771
        // Predicated region
        $region65: #{tpu_custom_call.1} parent=47 // pred_check
          %p773 = pneg %p219
        $region66: #{tpu_custom_call.1} parent=47 // pred_check_branch
          %775 = sbr.rel (%p773) target = $region68
        $region67: #{tpu_custom_call.1} parent=47 // pred_region
          %s776 = smul.u32 2, %s29
          %s777 = smul.u32 4, %s30
          %s779 = ssub.s32 512, 512
          %780 = vsyncadd %s769, %s779
          %s781 = smul.addr %s776, 8
          %s782 = sadd.s32 %s777, %s781
          %s783 = smul.addr %s782, 64
          %s784 = scalar_lea.hbm %s7, %s783
          %s785 = sshll.u32 %s772, 4
          %s786 = int_to_ptr.vmem [resolvable:$true] %s785
          %791 = dma.vmem_to_hbm [thread:$0]  %s786, 512, %s784, %s769, 256, 512, 16
        $region68: #{tpu_custom_call.1} parent=47 // pred_fallthru
          _
      $region48: #{tpu_custom_call.1} parent=5 // pred_fallthru
        _
      %p792 = scmp.le.s32.totalorder 2, %s20
      // Predicated region
      $region69: #{tpu_custom_call.1} parent=5 // pred_check
        %p793 = pneg %p792
      $region70: #{tpu_custom_call.1} parent=5 // pred_check_branch
        %795 = sbr.rel (%p793) target = $region72
      $region71: #{tpu_custom_call.1} parent=5 // pred_region
        %s796 = ssub.s32 %s20, 2
        // Predicated region
        $region73: #{tpu_custom_call.1} parent=71 // pred_check
          %p797 = pneg %p225
        $region74: #{tpu_custom_call.1} parent=71 // pred_check_branch
          %799 = sbr.rel (%p797) target = $region76
        $region75: #{tpu_custom_call.1} parent=71 // pred_region
          %s800 = sand.u32 %s210, 1
          %s801 = scalar_lea.sflag [#allocation5], %s800
          %s802 = sand.u32 %s210, 1
          %s803 = smul.addr %s802, 32
          %s804 = scalar_lea.vmem [#allocation9], %s803
          %805 = dma.done %s801, 512
        $region76: #{tpu_custom_call.1} parent=71 // pred_fallthru
          _
      $region72: #{tpu_custom_call.1} parent=5 // pred_fallthru
        _
    $region6: #{tpu_custom_call.1} parent=1 // loop_footer
      %s24 = sadd.s32 1, %s20
    $region7: #{tpu_custom_call.1} parent=1 // loop_footer_branch
      %19 = sbr.rel target = $region3
    $region8: #{tpu_custom_call.1} parent=1 // loop_exit
      _
    %806 = vsyncpa [#allocation4], 1
    %s807 = scalar_lea.sflag [#allocation4], 1
    %808 = vsyncpa %s807, 1
    %809 = vsyncpa [#allocation7], 1
    %810 = vsyncpa [#allocation5], 1
    %s811 = scalar_lea.sflag [#allocation5], 1
    %812 = vsyncpa %s811, 1

</llo_original>
